<compile_context>
chip_gen: v6e
topology: v6e:2x2x1
jax: 0.10.0
libtpu: 0.0.40
codegen_flags: <defaults>
</compile_context>

<pallas_src>
import jax
import jax.numpy as jnp
from jax.experimental import pallas as pl
from jax.experimental.pallas import tpu as pltpu

N_OUT = 128


def _mlp_kernel(tf_ref, ufp_ref, w1t_ref, w2_ref, w3_ref, b23_ref, o_ref):
    # Layer 1, target half: (ta, dim_in) @ (dim_in, 128), f32 accumulation.
    # The user half of layer 1 (+ b1) is precomputed per batch row (ufp_ref).
    h = jnp.dot(tf_ref[0], w1t_ref[...], preferred_element_type=jnp.float32)
    h = jnp.maximum(h + ufp_ref[0], 0.0)
    # Layer 2: Linear(128 -> 128) + ReLU (bf16 MXU inputs, f32 accumulate).
    h = jnp.dot(h.astype(w2_ref.dtype), w2_ref[...],
                preferred_element_type=jnp.float32)
    h = jnp.maximum(h + b23_ref[0:1, :], 0.0)
    # Output layer: Linear(128 -> 128); accumulate f32, single cast on store.
    o_ref[0] = (
        jnp.dot(h.astype(w3_ref.dtype), w3_ref[...],
                preferred_element_type=jnp.float32)
        + b23_ref[1:2, :]
    ).astype(o_ref.dtype)


def advantage_net_forward(user_feature, target_features, params, *, ta=1024,
                          compute_dtype=jnp.bfloat16):
    """user_feature: (B, dim_in); target_features: (B, A, dim_in) -> (B, A, 128)."""
    B, dim_in = user_feature.shape
    A = target_features.shape[1]

    w1, b1, w2, b2, w3, b3 = params

    # Split W1 (out, 2*dim_in) into user / target halves so the concatenated
    # activation is never built in HBM. PyTorch concat order is [uf, tf].
    w1_u = w1[:, :dim_in]                       # (128, dim_in)  -> user half
    w1_t = w1[:, dim_in:]                       # (128, dim_in)  -> target half
    # Tiny per-batch-row projection, done once per batch row in f32.
    uf_proj = (user_feature @ w1_u.T + b1).reshape(B, 1, N_OUT)   # (B, 1, 128) f32

    # Kernel operands: weights as (in, out), bf16 for MXU throughput.
    w1t_t = w1_t.T.astype(compute_dtype)        # (dim_in, 128)
    w2t = w2.T.astype(compute_dtype)            # (128, 128)
    w3t = w3.T.astype(compute_dtype)            # (128, 128)
    b23 = jnp.stack([b2, b3], axis=0).astype(jnp.float32)         # (2, 128)

    tf = target_features.astype(compute_dtype)  # (B, A, dim_in)

    # Row tile over the action axis: large (default 1024) but capped at the
    # (8-aligned) action count; pad A so it divides evenly.
    ta_eff = min(ta, ((A + 7) // 8) * 8)
    A_pad = ((A + ta_eff - 1) // ta_eff) * ta_eff
    if A_pad != A:
        tf = jnp.pad(tf, ((0, 0), (0, A_pad - A), (0, 0)))

    grid = (B, A_pad // ta_eff)

    out = pl.pallas_call(
        _mlp_kernel,
        out_shape=jax.ShapeDtypeStruct((B, A_pad, N_OUT), jnp.float32),
        grid_spec=pltpu.PrefetchScalarGridSpec(
            num_scalar_prefetch=0,
            grid=grid,
            in_specs=[
                pl.BlockSpec((1, ta_eff, dim_in), lambda b, j: (b, j, 0)),  # target tile
                pl.BlockSpec((1, 1, N_OUT), lambda b, j: (b, 0, 0)),        # user proj (+b1)
                pl.BlockSpec((dim_in, N_OUT), lambda b, j: (0, 0)),         # W1_t^T
                pl.BlockSpec((N_OUT, N_OUT), lambda b, j: (0, 0)),          # W2^T
                pl.BlockSpec((N_OUT, N_OUT), lambda b, j: (0, 0)),          # W3^T
                pl.BlockSpec((2, N_OUT), lambda b, j: (0, 0)),              # [b2; b3]
            ],
            out_specs=pl.BlockSpec((1, ta_eff, N_OUT), lambda b, j: (b, j, 0)),
        ),
        compiler_params=pltpu.CompilerParams(
            dimension_semantics=("parallel", "parallel"),
        ),
    )(tf, uf_proj, w1t_t, w2t, w3t, b23)

    return out[:, :A, :]


def init_params(key, dim_in):
    """Deterministic synthetic parameters, PyTorch Linear shapes (out, in)."""
    n_out = 128
    keys = jax.random.split(key, 6)

    def lin(kw, kb, fan_in, fan_out):
        bound = 1.0 / jnp.sqrt(fan_in)
        w = jax.random.uniform(kw, (fan_out, fan_in), jnp.float32, -bound, bound)
        b = jax.random.uniform(kb, (fan_out,), jnp.float32, -bound, bound)
        return w, b

    w1, b1 = lin(keys[0], keys[1], dim_in * 2, n_out)
    w2, b2 = lin(keys[2], keys[3], n_out, n_out)
    w3, b3 = lin(keys[4], keys[5], n_out, n_out)
    # TODO(synk): fcb3 (Linear(64, 32)+ReLU) exists in __init__ but is unused in forward; omitted.
    return (w1, b1, w2, b2, w3, b3)


def reference_forward(user_feature, target_features, params):
    """Pure-JAX f32 reference mirroring the PyTorch forward."""
    w1, b1, w2, b2, w3, b3 = params
    B, dim_in = user_feature.shape
    A = target_features.shape[1]
    uf = jnp.broadcast_to(user_feature[:, None, :], (B, A, dim_in))
    x = jnp.concatenate([uf, target_features], axis=2).reshape(B * A, 2 * dim_in)
    h = jnp.maximum(x @ w1.T + b1, 0.0)
    h = jnp.maximum(h @ w2.T + b2, 0.0)
    o = h @ w3.T + b3
    return o.reshape(B, A, 128)


if __name__ == "__main__":
    key = jax.random.PRNGKey(0)
    k_uf, k_tf, k_params = jax.random.split(key, 3)

    B, A, dim_in = 2, 8, 16
    user_feature = jax.random.normal(k_uf, (B, dim_in), jnp.float32)
    target_features = jax.random.normal(k_tf, (B, A, dim_in), jnp.float32)
    params = init_params(k_params, dim_in)

    out = advantage_net_forward(user_feature, target_features, params)
    out = jax.block_until_ready(out)

    ref = reference_forward(user_feature, target_features, params)
    assert out.shape == (B, A, 128), out.shape
    err = float(jnp.max(jnp.abs(out - ref)))
    # bf16 MXU inputs with f32 accumulation vs. an f32 reference.
    assert err < 5e-2, f"max abs diff {err}"
    print("KERNEL_OK")
</pallas_src>

<mosaic_0001>
module attributes {stable_mosaic.version = 11 : i64} {
  func.func @_mlp_kernel(%arg0: i32, %arg1: i32, %arg2: memref<1x8x16xbf16, #tpu.memory_space<vmem>>, %arg3: memref<1x1x128xf32, #tpu.memory_space<vmem>>, %arg4: memref<16x128xbf16, #tpu.memory_space<vmem>>, %arg5: memref<128x128xbf16, #tpu.memory_space<vmem>>, %arg6: memref<128x128xbf16, #tpu.memory_space<vmem>>, %arg7: memref<2x128xf32, #tpu.memory_space<vmem>>, %arg8: memref<1x8x128xf32, #tpu.memory_space<vmem>>) attributes {dimension_semantics = [#tpu.dimension_semantics<parallel>, #tpu.dimension_semantics<parallel>], iteration_bounds = array<i64: 2, 1>, scalar_prefetch = 0 : i64, scratch_operands = 0 : i64, tpu.core_type = #tpu.core_type<tc>, window_params = [{transform_indices = @transform_0, window_bounds = array<i64: 1, 8, 16>}, {transform_indices = @transform_1, window_bounds = array<i64: 1, 1, 128>}, {pipeline_mode = #tpu.pipeline_mode<synchronous>, transform_indices = @transform_2, window_bounds = array<i64: 16, 128>}, {pipeline_mode = #tpu.pipeline_mode<synchronous>, transform_indices = @transform_3, window_bounds = array<i64: 128, 128>}, {pipeline_mode = #tpu.pipeline_mode<synchronous>, transform_indices = @transform_4, window_bounds = array<i64: 128, 128>}, {pipeline_mode = #tpu.pipeline_mode<synchronous>, transform_indices = @transform_5, window_bounds = array<i64: 2, 128>}, {transform_indices = @transform_6, window_bounds = array<i64: 1, 8, 128>}]} {
    %c0 = arith.constant 0 : index
    %c0_0 = arith.constant 0 : index
    %c0_1 = arith.constant 0 : index
    %0 = vector.load %arg2[%c0, %c0_0, %c0_1] : memref<1x8x16xbf16, #tpu.memory_space<vmem>>, vector<1x8x16xbf16>
    %1 = vector.shape_cast %0 : vector<1x8x16xbf16> to vector<8x16xbf16>
    %c0_2 = arith.constant 0 : index
    %c0_3 = arith.constant 0 : index
    %2 = vector.load %arg4[%c0_2, %c0_3] : memref<16x128xbf16, #tpu.memory_space<vmem>>, vector<16x128xbf16>
    %cst = arith.constant dense<0.000000e+00> : vector<8x128xf32>
    %3 = tpu.matmul %1, %2, %cst {dimension_numbers = #tpu.dot_dimension_numbers<[1], [0], [0], [1], [0, 0, 1, 1], [], []>} : vector<8x16xbf16>, vector<16x128xbf16>, vector<8x128xf32> -> vector<8x128xf32>
    %c0_4 = arith.constant 0 : index
    %c0_5 = arith.constant 0 : index
    %c0_6 = arith.constant 0 : index
    %4 = vector.load %arg3[%c0_4, %c0_5, %c0_6] : memref<1x1x128xf32, #tpu.memory_space<vmem>>, vector<1x1x128xf32>
    %5 = vector.shape_cast %4 : vector<1x1x128xf32> to vector<1x128xf32>
    %6 = vector.broadcast %5 : vector<1x128xf32> to vector<8x128xf32>
    %7 = arith.addf %3, %6 : vector<8x128xf32>
    %cst_7 = arith.constant 0.000000e+00 : f32
    %8 = vector.broadcast %cst_7 : f32 to vector<8x128xf32>
    %9 = arith.maximumf %7, %8 : vector<8x128xf32>
    %10 = arith.truncf %9 : vector<8x128xf32> to vector<8x128xbf16>
    %c0_8 = arith.constant 0 : index
    %c0_9 = arith.constant 0 : index
    %11 = vector.load %arg5[%c0_8, %c0_9] : memref<128x128xbf16, #tpu.memory_space<vmem>>, vector<128x128xbf16>
    %cst_10 = arith.constant dense<0.000000e+00> : vector<8x128xf32>
    %12 = tpu.matmul %10, %11, %cst_10 {dimension_numbers = #tpu.dot_dimension_numbers<[1], [0], [0], [1], [0, 0, 1, 1], [], []>} : vector<8x128xbf16>, vector<128x128xbf16>, vector<8x128xf32> -> vector<8x128xf32>
    %c0_11 = arith.constant 0 : index
    %c0_12 = arith.constant 0 : index
    %13 = vector.load %arg7[%c0_11, %c0_12] : memref<2x128xf32, #tpu.memory_space<vmem>>, vector<1x128xf32>
    %14 = vector.broadcast %13 : vector<1x128xf32> to vector<8x128xf32>
    %15 = arith.addf %12, %14 : vector<8x128xf32>
    %cst_13 = arith.constant 0.000000e+00 : f32
    %16 = vector.broadcast %cst_13 : f32 to vector<8x128xf32>
    %17 = arith.maximumf %15, %16 : vector<8x128xf32>
    %18 = arith.truncf %17 : vector<8x128xf32> to vector<8x128xbf16>
    %c0_14 = arith.constant 0 : index
    %c0_15 = arith.constant 0 : index
    %19 = vector.load %arg6[%c0_14, %c0_15] : memref<128x128xbf16, #tpu.memory_space<vmem>>, vector<128x128xbf16>
    %cst_16 = arith.constant dense<0.000000e+00> : vector<8x128xf32>
    %20 = tpu.matmul %18, %19, %cst_16 {dimension_numbers = #tpu.dot_dimension_numbers<[1], [0], [0], [1], [0, 0, 1, 1], [], []>} : vector<8x128xbf16>, vector<128x128xbf16>, vector<8x128xf32> -> vector<8x128xf32>
    %c1 = arith.constant 1 : index
    %c0_17 = arith.constant 0 : index
    %21 = vector.load %arg7[%c1, %c0_17] : memref<2x128xf32, #tpu.memory_space<vmem>>, vector<1x128xf32>
    %22 = vector.broadcast %21 : vector<1x128xf32> to vector<8x128xf32>
    %23 = arith.addf %20, %22 : vector<8x128xf32>
    %c0_18 = arith.constant 0 : index
    %c0_19 = arith.constant 0 : index
    %c0_20 = arith.constant 0 : index
    %24 = vector.load %arg8[%c0_18, %c0_19, %c0_20] : memref<1x8x128xf32, #tpu.memory_space<vmem>>, vector<1x8x128xf32>
    %25 = vector.shape_cast %24 : vector<1x8x128xf32> to vector<8x128xf32>
    %26 = vector.shape_cast %23 : vector<8x128xf32> to vector<1x8x128xf32>
    tpu.vector_store %arg8[%c0_18, %c0_19, %c0_20], %26 {strides = array<i32>} : memref<1x8x128xf32, #tpu.memory_space<vmem>>, vector<1x8x128xf32>,
    return
  }
  func.func @transform_0(%arg0: i32, %arg1: i32) -> (i32, i32, i32) {
    %c0_i32 = arith.constant 0 : i32
    %c0_i32_0 = arith.constant 0 : i32
    return %arg0, %arg1, %c0_i32 : i32, i32, i32
  }
  func.func @transform_1(%arg0: i32, %arg1: i32) -> (i32, i32, i32) {
    %c0_i32 = arith.constant 0 : i32
    %c0_i32_0 = arith.constant 0 : i32
    %c0_i32_1 = arith.constant 0 : i32
    return %arg0, %c0_i32, %c0_i32_0 : i32, i32, i32
  }
  func.func @transform_2(%arg0: i32, %arg1: i32) -> (i32, i32) {
    %c0_i32 = arith.constant 0 : i32
    %c0_i32_0 = arith.constant 0 : i32
    %c0_i32_1 = arith.constant 0 : i32
    return %c0_i32, %c0_i32_0 : i32, i32
  }
  func.func @transform_3(%arg0: i32, %arg1: i32) -> (i32, i32) {
    %c0_i32 = arith.constant 0 : i32
    %c0_i32_0 = arith.constant 0 : i32
    %c0_i32_1 = arith.constant 0 : i32
    return %c0_i32, %c0_i32_0 : i32, i32
  }
  func.func @transform_4(%arg0: i32, %arg1: i32) -> (i32, i32) {
    %c0_i32 = arith.constant 0 : i32
    %c0_i32_0 = arith.constant 0 : i32
    %c0_i32_1 = arith.constant 0 : i32
    return %c0_i32, %c0_i32_0 : i32, i32
  }
  func.func @transform_5(%arg0: i32, %arg1: i32) -> (i32, i32) {
    %c0_i32 = arith.constant 0 : i32
    %c0_i32_0 = arith.constant 0 : i32
    %c0_i32_1 = arith.constant 0 : i32
    return %c0_i32, %c0_i32_0 : i32, i32
  }
  func.func @transform_6(%arg0: i32, %arg1: i32) -> (i32, i32, i32) {
    %c0_i32 = arith.constant 0 : i32
    %c0_i32_0 = arith.constant 0 : i32
    return %arg0, %arg1, %c0_i32 : i32, i32, i32
  }
}

</mosaic_0001>

<llo_original>
// kernel: tpu_custom_call.1
$region0: #{tpu_custom_call.1}
  #allocation0 [shape = 'u32[]', space=smem, size = 0x4, offset = 0x4, fixed_abs, tag = 'smem constant byte address 0x4 - core index']
  #allocation1 [shape = 'u32[144,128]{1,0:T(1,128)}', space=vmem, size = 0x12000, scoped, tag = 'internal scratch']
  %s0 = inlined_call_operand.hbm [shape: bf16[2,8,16], index: 0, kind: input, shape index: {}]
  %s1 = inlined_call_operand.hbm [shape: f32[2,1,128], index: 1, kind: input, shape index: {}]
  %s2 = inlined_call_operand.hbm [shape: bf16[16,128], index: 2, kind: input, shape index: {}]
  %s3 = inlined_call_operand.hbm [shape: bf16[128,128], index: 3, kind: input, shape index: {}]
  %s4 = inlined_call_operand.hbm [shape: bf16[128,128], index: 4, kind: input, shape index: {}]
  %s5 = inlined_call_operand.vmem [shape: f32[2,128], index: 5, kind: input, shape index: {}]
  %s6 = inlined_call_operand.hbm [shape: f32[2,8,128], index: 6, kind: output, shape index: {}]
  %s7 = sld [smem:[#allocation0]]
  $region77: #{tpu_custom_call.1} parent=0
    _
  %s9 = ssub.s32 1, %s7
  %s10 = scalar_select 0, %s9, %s7
  $region1: #{tpu_custom_call.1} parent=0
    #allocation2 [shape = 'u8[4096]{0}', space=vmem, size = 0x1000, scoped, tag = 'input window, operand 0']
    #allocation3 [shape = 's32[2]{0}', space=sflag, size = 0x8, scoped, tag = 'scoped memory for tpu_custom_call.1']
    #allocation4 [shape = 's32[2]{0}', space=sflag, size = 0x8, scoped, tag = 'scoped memory for tpu_custom_call.1']
    #allocation5 [shape = 'u8[1024]{0}', space=vmem, size = 0x400, scoped, tag = 'input window, operand 1']
    #allocation6 [shape = 's32[2]{0}', space=sflag, size = 0x8, scoped, tag = 'scoped memory for tpu_custom_call.1']
    #allocation7 [shape = 'u8[4096]{0}', space=vmem, size = 0x1000, scoped, tag = 'input window, operand 2, single buffered']
    #allocation8 [shape = 'u8[32768]{0}', space=vmem, size = 0x8000, scoped, tag = 'input window, operand 3, single buffered']
    #allocation9 [shape = 's32[1]{0}', space=sflag, size = 0x4, scoped, tag = 'scoped memory for tpu_custom_call.1']
    #allocation10 [shape = 'u8[32768]{0}', space=vmem, size = 0x8000, scoped, tag = 'input window, operand 4, single buffered']
    #allocation11 [shape = 'u8[8192]{0}', space=vmem, size = 0x2000, scoped, tag = 'output window, operand 0']
    %11 = vsyncpa [#allocation3], 0
    %s12 = scalar_lea.sflag [#allocation3], 1
    %13 = vsyncpa %s12, 0
    %14 = vsyncpa [#allocation6], 0
    %s15 = scalar_lea.sflag [#allocation6], 1
    %16 = vsyncpa %s15, 0
    %17 = vsyncpa [#allocation9], 0
    %18 = vsyncpa [#allocation4], 0
    %s19 = scalar_lea.sflag [#allocation4], 1
    %20 = vsyncpa %s19, 0
    loop: start=0, step=1, limit=4
    $region2: #{tpu_custom_call.1} parent=1 // loop_pre_header
      _
    $region3: #{tpu_custom_call.1} parent=1 // loop_header
      %s22 = sphi 0, %s26
      %p23 = scmp.ge.s32.totalorder %s22, 4
      %s29 = sphi 0, %s41
      %s30 = sphi 0, %s37
      %s31 = sphi 0, %s29
      %s32 = sphi 0, %s30
      %s33 = sphi 0, %s31
      %s34 = sphi 0, %s32
      %s46 = sphi 0, %s48
      %s49 = sphi 0, %s46
      %s50 = sphi 0, %s49
      %s66 = sphi 0, %s50
      %s72 = sphi 0, %s74
      %s75 = sphi 0, %s72
      %s76 = sphi 0, %s75
      %s92 = sphi 0, %s76
      %s96 = sphi 0, %s96
      %s98 = sphi 0, %s96
      %s99 = sphi 0, %s98
      %s113 = sphi 0, %s99
      %s117 = sphi 0, %s117
      %s119 = sphi 0, %s117
      %s120 = sphi 0, %s119
      %s134 = sphi 0, %s120
      %s138 = sphi 0, %s138
      %s140 = sphi 0, %s138
      %s141 = sphi 0, %s140
      %s155 = sphi 0, %s141
      %s159 = sphi 0, %s159
      %s161 = sphi 0, %s159
      %s162 = sphi 0, %s161
      %s176 = sphi 0, %s162
      %s184 = sphi 0, %s186
      %s187 = sphi 0, %s184
      %s188 = sphi 0, %s187
      %s204 = sphi 0, %s188
    $region4: #{tpu_custom_call.1} parent=1 // loop_header_branch
      %25 = sbr.rel (%p23) target = $region8
    $region5: #{tpu_custom_call.1} parent=1 // loop_body
      %s27 = ssub.s32 %s22, 1
      %s28 = ssub.s32 %s22, 2
      %s35 = sadd.s32 1, %s30
      %p36 = scmp.ge.s32.totalorder %s35, 1
      %s37 = scalar_select %p36, 0, %s35
      %s38 = sadd.s32 1, %s29
      %s39 = scalar_select %p36, %s38, %s29
      %p40 = scmp.ge.s32.totalorder %s39, 2
      %s41 = scalar_select %p40, 0, %s39
      %s42 = ssub.s32 %s29, %s41
      %s43 = ssub.s32 %s30, %s37
      %s44 = sor.u32 %s42, %s43
      %p45 = scmp.eq.s32.totalorder %s44, 0
      %s47 = sadd.s32 %s46, 1
      %s48 = scalar_select %p45, %s46, %s47
      %p51 = pneg %p45
      %p52 = scmp.eq.s32.totalorder %s22, 1
      %p53 = por %p51, %p52
      %p54 = scmp.ne.s32.totalorder %s46, %s49
      %p55 = scmp.eq.s32.totalorder %s22, 0
      %p56 = por %p54, %p55
      %p57 = scmp.ne.s32.totalorder %s46, %s49
      %p58 = scmp.eq.s32.totalorder %s27, 1
      %p59 = por %p57, %p58
      %p60 = scmp.ne.s32.totalorder %s49, %s50
      %p61 = scmp.eq.s32.totalorder %s27, 0
      %p62 = por %p60, %p61
      %p63 = scmp.ne.s32.totalorder %s49, %s50
      %p64 = scmp.eq.s32.totalorder %s28, 1
      %p65 = por %p63, %p64
      %p67 = scmp.ne.s32.totalorder %s50, %s66
      %p68 = scmp.eq.s32.totalorder %s28, 0
      %p69 = por %p67, %p68
      %s70 = ssub.s32 %s29, %s41
      %p71 = scmp.eq.s32.totalorder %s70, 0
      %s73 = sadd.s32 %s72, 1
      %s74 = scalar_select %p71, %s72, %s73
      %p77 = pneg %p71
      %p78 = scmp.eq.s32.totalorder %s22, 1
      %p79 = por %p77, %p78
      %p80 = scmp.ne.s32.totalorder %s72, %s75
      %p81 = scmp.eq.s32.totalorder %s22, 0
      %p82 = por %p80, %p81
      %p83 = scmp.ne.s32.totalorder %s72, %s75
      %p84 = scmp.eq.s32.totalorder %s27, 1
      %p85 = por %p83, %p84
      %p86 = scmp.ne.s32.totalorder %s75, %s76
      %p87 = scmp.eq.s32.totalorder %s27, 0
      %p88 = por %p86, %p87
      %p89 = scmp.ne.s32.totalorder %s75, %s76
      %p90 = scmp.eq.s32.totalorder %s28, 1
      %p91 = por %p89, %p90
      %p93 = scmp.ne.s32.totalorder %s76, %s92
      %p94 = scmp.eq.s32.totalorder %s28, 0
      %p95 = por %p93, %p94
      %s97 = sadd.s32 %s96, 1
      %p100 = scmp.eq.s32.totalorder %s22, 1
      %p101 = scmp.ne.s32.totalorder %s96, %s98
      %p102 = scmp.eq.s32.totalorder %s22, 0
      %p103 = por %p101, %p102
      %p104 = scmp.ne.s32.totalorder %s96, %s98
      %p105 = scmp.eq.s32.totalorder %s27, 1
      %p106 = por %p104, %p105
      %p107 = scmp.ne.s32.totalorder %s98, %s99
      %p108 = scmp.eq.s32.totalorder %s27, 0
      %p109 = por %p107, %p108
      %p110 = scmp.ne.s32.totalorder %s98, %s99
      %p111 = scmp.eq.s32.totalorder %s28, 1
      %p112 = por %p110, %p111
      %p114 = scmp.ne.s32.totalorder %s99, %s113
      %p115 = scmp.eq.s32.totalorder %s28, 0
      %p116 = por %p114, %p115
      %s118 = sadd.s32 %s117, 1
      %p121 = scmp.eq.s32.totalorder %s22, 1
      %p122 = scmp.ne.s32.totalorder %s117, %s119
      %p123 = scmp.eq.s32.totalorder %s22, 0
      %p124 = por %p122, %p123
      %p125 = scmp.ne.s32.totalorder %s117, %s119
      %p126 = scmp.eq.s32.totalorder %s27, 1
      %p127 = por %p125, %p126
      %p128 = scmp.ne.s32.totalorder %s119, %s120
      %p129 = scmp.eq.s32.totalorder %s27, 0
      %p130 = por %p128, %p129
      %p131 = scmp.ne.s32.totalorder %s119, %s120
      %p132 = scmp.eq.s32.totalorder %s28, 1
      %p133 = por %p131, %p132
      %p135 = scmp.ne.s32.totalorder %s120, %s134
      %p136 = scmp.eq.s32.totalorder %s28, 0
      %p137 = por %p135, %p136
      %s139 = sadd.s32 %s138, 1
      %p142 = scmp.eq.s32.totalorder %s22, 1
      %p143 = scmp.ne.s32.totalorder %s138, %s140
      %p144 = scmp.eq.s32.totalorder %s22, 0
      %p145 = por %p143, %p144
      %p146 = scmp.ne.s32.totalorder %s138, %s140
      %p147 = scmp.eq.s32.totalorder %s27, 1
      %p148 = por %p146, %p147
      %p149 = scmp.ne.s32.totalorder %s140, %s141
      %p150 = scmp.eq.s32.totalorder %s27, 0
      %p151 = por %p149, %p150
      %p152 = scmp.ne.s32.totalorder %s140, %s141
      %p153 = scmp.eq.s32.totalorder %s28, 1
      %p154 = por %p152, %p153
      %p156 = scmp.ne.s32.totalorder %s141, %s155
      %p157 = scmp.eq.s32.totalorder %s28, 0
      %p158 = por %p156, %p157
      %s160 = sadd.s32 %s159, 1
      %p163 = scmp.eq.s32.totalorder %s22, 1
      %p164 = scmp.ne.s32.totalorder %s159, %s161
      %p165 = scmp.eq.s32.totalorder %s22, 0
      %p166 = por %p164, %p165
      %p167 = scmp.ne.s32.totalorder %s159, %s161
      %p168 = scmp.eq.s32.totalorder %s27, 1
      %p169 = por %p167, %p168
      %p170 = scmp.ne.s32.totalorder %s161, %s162
      %p171 = scmp.eq.s32.totalorder %s27, 0
      %p172 = por %p170, %p171
      %p173 = scmp.ne.s32.totalorder %s161, %s162
      %p174 = scmp.eq.s32.totalorder %s28, 1
      %p175 = por %p173, %p174
      %p177 = scmp.ne.s32.totalorder %s162, %s176
      %p178 = scmp.eq.s32.totalorder %s28, 0
      %p179 = por %p177, %p178
      %s180 = ssub.s32 %s29, %s41
      %s181 = ssub.s32 %s30, %s37
      %s182 = sor.u32 %s180, %s181
      %p183 = scmp.eq.s32.totalorder %s182, 0
      %s185 = sadd.s32 %s184, 1
      %s186 = scalar_select %p183, %s184, %s185
      %p189 = pneg %p183
      %p190 = scmp.eq.s32.totalorder %s22, 1
      %p191 = por %p189, %p190
      %p192 = scmp.ne.s32.totalorder %s184, %s187
      %p193 = scmp.eq.s32.totalorder %s22, 0
      %p194 = por %p192, %p193
      %p195 = scmp.ne.s32.totalorder %s184, %s187
      %p196 = scmp.eq.s32.totalorder %s27, 1
      %p197 = por %p195, %p196
      %p198 = scmp.ne.s32.totalorder %s187, %s188
      %p199 = scmp.eq.s32.totalorder %s27, 0
      %p200 = por %p198, %p199
      %p201 = scmp.ne.s32.totalorder %s187, %s188
      %p202 = scmp.eq.s32.totalorder %s28, 1
      %p203 = por %p201, %p202
      %p205 = scmp.ne.s32.totalorder %s188, %s204
      %p206 = scmp.eq.s32.totalorder %s28, 0
      %p207 = por %p205, %p206
      %p208 = scmp.le.s32.totalorder 1, %s22
      %p209 = scmp.lt.s32.totalorder %s22, 3
      %p210 = pnand %p208, %p209
      %p211 = pneg %p210
      // Predicated region
      $region9: #{tpu_custom_call.1} parent=5 // pred_check
        _
      $region10: #{tpu_custom_call.1} parent=5 // pred_check_branch
        %213 = sbr.rel (%p210) target = $region12
      $region11: #{tpu_custom_call.1} parent=5 // pred_region
        %s214 = ssub.s32 %s22, 1
        // Predicated region
        $region13: #{tpu_custom_call.1} parent=11 // pred_check
          %p215 = pneg %p109
        $region14: #{tpu_custom_call.1} parent=11 // pred_check_branch
          %217 = sbr.rel (%p215) target = $region16
        $region15: #{tpu_custom_call.1} parent=11 // pred_region
          %s219 = ssub.s32 128, 128
          %220 = vsyncadd [#allocation6], %s219
          %s221 = sshll.u32 [#allocation7], 4
          %s222 = int_to_ptr.vmem [resolvable:$true] %s221
          %227 = dma.hbm_to_vmem [thread:$0]  %s2, 128, %s222, [#allocation6], 64, 64, 4
        $region16: #{tpu_custom_call.1} parent=11 // pred_fallthru
          _
        // Predicated region
        $region17: #{tpu_custom_call.1} parent=11 // pred_check
          %p228 = pneg %p130
        $region18: #{tpu_custom_call.1} parent=11 // pred_check_branch
          %230 = sbr.rel (%p228) target = $region20
        $region19: #{tpu_custom_call.1} parent=11 // pred_region
          %s232 = ssub.s32 1024, 1024
          %233 = vsyncadd [#allocation9], %s232
          %s234 = sshll.u32 [#allocation8], 4
          %s235 = int_to_ptr.vmem [resolvable:$true] %s234
          %240 = dma.hbm_to_vmem [thread:$0]  %s3, 1024, %s235, [#allocation9], 64, 64, 4
        $region20: #{tpu_custom_call.1} parent=11 // pred_fallthru
          _
        // Predicated region
        $region21: #{tpu_custom_call.1} parent=11 // pred_check
          %p241 = pneg %p151
        $region22: #{tpu_custom_call.1} parent=11 // pred_check_branch
          %243 = sbr.rel (%p241) target = $region24
        $region23: #{tpu_custom_call.1} parent=11 // pred_region
          %s245 = ssub.s32 1024, 1024
          %246 = vsyncadd [#allocation9], %s245
          %s247 = sshll.u32 [#allocation10], 4
          %s248 = int_to_ptr.vmem [resolvable:$true] %s247
          %253 = dma.hbm_to_vmem [thread:$0]  %s4, 1024, %s248, [#allocation9], 64, 64, 4
        $region24: #{tpu_custom_call.1} parent=11 // pred_fallthru
          _
        // Predicated region
        $region25: #{tpu_custom_call.1} parent=11 // pred_check
          %p254 = pneg %p172
        $region26: #{tpu_custom_call.1} parent=11 // pred_check_branch
          %256 = sbr.rel (%p254) target = $region28
        $region27: #{tpu_custom_call.1} parent=11 // pred_region
          _
        $region28: #{tpu_custom_call.1} parent=11 // pred_fallthru
          _
      $region12: #{tpu_custom_call.1} parent=5 // pred_fallthru
        _
      %p257 = scmp.lt.s32.totalorder %s22, 2
      // Predicated region
      $region29: #{tpu_custom_call.1} parent=5 // pred_check
        %p258 = pneg %p257
      $region30: #{tpu_custom_call.1} parent=5 // pred_check_branch
        %260 = sbr.rel (%p258) target = $region32
      $region31: #{tpu_custom_call.1} parent=5 // pred_region
        // Predicated region
        $region33: #{tpu_custom_call.1} parent=31 // pred_check
          %p261 = pneg %p56
        $region34: #{tpu_custom_call.1} parent=31 // pred_check_branch
          %263 = sbr.rel (%p261) target = $region36
        $region35: #{tpu_custom_call.1} parent=31 // pred_region
          %s264 = sand.u32 %s46, 1
          %s265 = scalar_lea.sflag [#allocation3], %s264
          %s266 = sand.u32 %s46, 1
          %s267 = smul.addr %s266, 4
          %s268 = scalar_lea.vmem [#allocation2], %s267
          %s270 = ssub.s32 64, 64
          %271 = vsyncadd %s265, %s270
          %s272 = sadd.s32 %s30, %s29
          %s273 = smul.addr %s272, 64
          %s274 = scalar_lea.hbm %s0, %s273
          %s276 = sshll.u32 %s268, 4
          %s277 = int_to_ptr.vmem [resolvable:$true] %s276
          %279 = dma.hbm_to_vmem [thread:$0]  %s274, 64, %s277, %s265
        $region36: #{tpu_custom_call.1} parent=31 // pred_fallthru
          _
        // Predicated region
        $region37: #{tpu_custom_call.1} parent=31 // pred_check
          %p280 = pneg %p82
        $region38: #{tpu_custom_call.1} parent=31 // pred_check_branch
          %282 = sbr.rel (%p280) target = $region40
        $region39: #{tpu_custom_call.1} parent=31 // pred_region
          %s283 = sand.u32 %s22, 1
          %s284 = scalar_lea.sflag [#allocation6], %s283
          %s285 = sand.u32 %s72, 1
          %s286 = scalar_lea.vmem [#allocation5], %s285
          %s288 = ssub.s32 16, 16
          %289 = vsyncadd %s284, %s288
          %s290 = smul.addr %s29, 16
          %s291 = scalar_lea.hbm %s1, %s290
          %s293 = sshll.u32 %s286, 4
          %s294 = int_to_ptr.vmem [resolvable:$true] %s293
          %296 = dma.hbm_to_vmem [thread:$0]  %s291, 16, %s294, %s284
        $region40: #{tpu_custom_call.1} parent=31 // pred_fallthru
          _
      $region32: #{tpu_custom_call.1} parent=5 // pred_fallthru
        _
      %p297 = scmp.le.s32.totalorder 1, %s22
      %p298 = scmp.lt.s32.totalorder %s22, 3
      %p299 = pnand %p297, %p298
      %p300 = pneg %p299
      // Predicated region
      $region41: #{tpu_custom_call.1} parent=5 // pred_check
        _
      $region42: #{tpu_custom_call.1} parent=5 // pred_check_branch
        %302 = sbr.rel (%p299) target = $region44
      $region43: #{tpu_custom_call.1} parent=5 // pred_region
        %s303 = ssub.s32 %s22, 1
        %s304 = sand.u32 %s49, 1
        %s305 = scalar_lea.sflag [#allocation3], %s304
        %s306 = sand.u32 %s49, 1
        %s307 = smul.addr %s306, 4
        %s308 = scalar_lea.vmem [#allocation2], %s307
        // Predicated region
        $region45: #{tpu_custom_call.1} parent=43 // pred_check
          %p309 = pneg %p62
        $region46: #{tpu_custom_call.1} parent=43 // pred_check_branch
          %311 = sbr.rel (%p309) target = $region48
        $region47: #{tpu_custom_call.1} parent=43 // pred_region
          %312 = dma.done %s305, 64
        $region48: #{tpu_custom_call.1} parent=43 // pred_fallthru
          _
        %s313 = sand.u32 %s27, 1
        %s314 = scalar_lea.sflag [#allocation6], %s313
        %s315 = sand.u32 %s75, 1
        %s316 = scalar_lea.vmem [#allocation5], %s315
        // Predicated region
        $region49: #{tpu_custom_call.1} parent=43 // pred_check
          %p317 = pneg %p88
        $region50: #{tpu_custom_call.1} parent=43 // pred_check_branch
          %319 = sbr.rel (%p317) target = $region52
        $region51: #{tpu_custom_call.1} parent=43 // pred_region
          %320 = dma.done %s314, 16
        $region52: #{tpu_custom_call.1} parent=43 // pred_fallthru
          _
        // Predicated region
        $region53: #{tpu_custom_call.1} parent=43 // pred_check
          %p321 = pneg %p109
        $region54: #{tpu_custom_call.1} parent=43 // pred_check_branch
          %323 = sbr.rel (%p321) target = $region56
        $region55: #{tpu_custom_call.1} parent=43 // pred_region
          %324 = dma.done [#allocation6], 128
        $region56: #{tpu_custom_call.1} parent=43 // pred_fallthru
          _
        // Predicated region
        $region57: #{tpu_custom_call.1} parent=43 // pred_check
          %p325 = pneg %p130
        $region58: #{tpu_custom_call.1} parent=43 // pred_check_branch
          %327 = sbr.rel (%p325) target = $region60
        $region59: #{tpu_custom_call.1} parent=43 // pred_region
          %328 = dma.done [#allocation9], 1024
        $region60: #{tpu_custom_call.1} parent=43 // pred_fallthru
          _
        // Predicated region
        $region61: #{tpu_custom_call.1} parent=43 // pred_check
          %p329 = pneg %p151
        $region62: #{tpu_custom_call.1} parent=43 // pred_check_branch
          %331 = sbr.rel (%p329) target = $region64
        $region63: #{tpu_custom_call.1} parent=43 // pred_region
          %332 = dma.done [#allocation9], 1024
        $region64: #{tpu_custom_call.1} parent=43 // pred_fallthru
          _
        %s333 = sand.u32 %s49, 1
        %s334 = scalar_lea.sflag [#allocation3], %s333
        %s335 = sand.u32 %s49, 1
        %s336 = smul.addr %s335, 4
        %s337 = scalar_lea.vmem [#allocation2], %s336
        %p338 = pneg %p62
        %p339 = pneg %p59
        %s340 = sand.u32 %s27, 1
        %s341 = scalar_lea.sflag [#allocation6], %s340
        %s342 = sand.u32 %s75, 1
        %s343 = scalar_lea.vmem [#allocation5], %s342
        %p344 = pneg %p88
        %p345 = pneg %p85
        %p346 = pneg %p109
        %p347 = pneg %p106
        %p348 = pneg %p130
        %p349 = pneg %p127
        %p350 = pneg %p151
        %p351 = pneg %p148
        %p352 = pneg %p172
        %p353 = pneg %p169
        %p354 = pneg %p200
        %p355 = pneg %p197
        %s356 = sand.u32 %s187, 1
        %s357 = scalar_lea.sflag [#allocation4], %s356
        %s358 = sand.u32 %s187, 1
        %s359 = smul.addr %s358, 8
        %s360 = scalar_lea.vmem [#allocation11], %s359
        %v362 = vld [vmem:[%s308] sm:$0xf]
        %v363 = vld [vmem:[#allocation7] sm:$0xf]
        %v364 = vld [vmem:[#allocation7 + $0x4] sm:$0xf]
        %v365 = vld [vmem:[%s316] sm:$0x1]
        %v367 = vlaneseq
        %v368 = vshrl.u32 %v367, 7
        %v369 = vsub.s32 0, %v368
        %v370 = vrot.slane %v365, %v369
        %v374 = vunpack.c.l.b16 %v363
        %v375 = vunpack.c.l.b16 %v364
        %v376 = vpack.c.b16 %v375, %v374
        %vm378 = vcmask 130048
        %v380 = vsel %vm378, %v362, 0
        %382 = vmatprep.subr.bf16.mxu0 0
        %383 = vmatpush1.bf16.msra.mxu0 0
        %384 = vmatprep.subr.bf16.mxu0 0
        %385 = vmatpush1.bf16.msra.mxu0 0
        %386 = vmatprep.subr.bf16.mxu0 0
        %387 = vmatpush1.bf16.msra.mxu0 0
        %388 = vmatprep.subr.bf16.mxu0 0
        %389 = vmatpush1.bf16.msra.mxu0 0
        %390 = vmatprep.subr.bf16.mxu0 0
        %391 = vmatpush1.bf16.msra.mxu0 0
        %392 = vmatprep.subr.bf16.mxu0 0
        %393 = vmatpush1.bf16.msra.mxu0 0
        %394 = vmatprep.subr.bf16.mxu0 0
        %395 = vmatpush1.bf16.msra.mxu0 0
        %396 = vmatprep.subr.bf16.mxu0 0
        %397 = vmatpush1.bf16.msra.mxu0 %v376
        %398 = vmatprep.subr.bf16.mxu0 0
        %399 = vmatpush2.bf16.msra.mxu0 0
        %400 = vmatprep.subr.bf16.mxu0 0
        %401 = vmatpush2.bf16.msra.mxu0 0
        %402 = vmatprep.subr.bf16.mxu0 0
        %403 = vmatpush2.bf16.msra.mxu0 0
        %404 = vmatprep.subr.bf16.mxu0 0
        %405 = vmatpush2.bf16.msra.mxu0 0
        %406 = vmatprep.subr.bf16.mxu0 0
        %407 = vmatpush2.bf16.msra.mxu0 0
        %408 = vmatprep.subr.bf16.mxu0 0
        %409 = vmatpush2.bf16.msra.mxu0 0
        %410 = vmatprep.subr.bf16.mxu0 0
        %411 = vmatpush2.bf16.msra.mxu0 0
        %412 = vmatprep.subr.bf16.mxu0 0
        %413 = vmatpush2.bf16.msra.mxu0 0
        %414 = vmatprep.mubr.bf16.mxu0 0
        %415 = vmatmul.mubr.bf16.gmra.mxu0 %v380
        %v416 = vpop.f32.mrf.mxu0
        %v417 = vadd.f32 %v370, %v416
        %v418 = vpop.f32.mrf.mxu0
        %v419 = vpop.f32.mrf.mxu0
        %v420 = vpop.f32.mrf.mxu0
        %421 = vdwg.mxu0
        %v422 = vmax.f32 %v417, 0.0
        %v423 = vpack.c.bf16 %v422, %v422
        %v424 = vld [vmem:[#allocation8] sm:$0xf]
        %v425 = vld [vmem:[#allocation8 + $0x4] sm:$0xf]
        %v426 = vld [vmem:[#allocation8 + $0x8] sm:$0xf]
        %v427 = vld [vmem:[#allocation8 + $0xc] sm:$0xf]
        %v428 = vld [vmem:[#allocation8 + $0x10] sm:$0xf]
        %v429 = vld [vmem:[#allocation8 + $0x14] sm:$0xf]
        %v430 = vld [vmem:[#allocation8 + $0x18] sm:$0xf]
        %v431 = vld [vmem:[#allocation8 + $0x1c] sm:$0xf]
        %v432 = vld [vmem:[#allocation8 + $0x20] sm:$0xf]
        %v433 = vld [vmem:[#allocation8 + $0x24] sm:$0xf]
        %v434 = vld [vmem:[#allocation8 + $0x28] sm:$0xf]
        %v435 = vld [vmem:[#allocation8 + $0x2c] sm:$0xf]
        %v436 = vld [vmem:[#allocation8 + $0x30] sm:$0xf]
        %v437 = vld [vmem:[#allocation8 + $0x34] sm:$0xf]
        %v438 = vld [vmem:[#allocation8 + $0x38] sm:$0xf]
        %v439 = vld [vmem:[#allocation8 + $0x3c] sm:$0xf]
        %v440 = vld [vmem:[%s5] sm:$0x1]
        %v441 = vlaneseq
        %v442 = vshrl.u32 %v441, 7
        %v443 = vsub.s32 0, %v442
        %v444 = vrot.slane %v440, %v443
        %v461 = vunpack.c.l.b16 %v424
        %v462 = vunpack.c.l.b16 %v425
        %v463 = vunpack.c.l.b16 %v426
        %v464 = vunpack.c.l.b16 %v427
        %v465 = vunpack.c.l.b16 %v428
        %v466 = vunpack.c.l.b16 %v429
        %v467 = vunpack.c.l.b16 %v430
        %v468 = vunpack.c.l.b16 %v431
        %v469 = vunpack.c.l.b16 %v432
        %v470 = vunpack.c.l.b16 %v433
        %v471 = vunpack.c.l.b16 %v434
        %v472 = vunpack.c.l.b16 %v435
        %v473 = vunpack.c.l.b16 %v436
        %v474 = vunpack.c.l.b16 %v437
        %v475 = vunpack.c.l.b16 %v438
        %v476 = vunpack.c.l.b16 %v439
        %v477 = vpack.c.b16 %v462, %v461
        %v478 = vpack.c.b16 %v464, %v463
        %v479 = vpack.c.b16 %v466, %v465
        %v480 = vpack.c.b16 %v468, %v467
        %v481 = vpack.c.b16 %v470, %v469
        %v482 = vpack.c.b16 %v472, %v471
        %v483 = vpack.c.b16 %v474, %v473
        %v484 = vpack.c.b16 %v476, %v475
        %493 = vmatprep.subr.bf16.mxu0 0
        %494 = vmatpush1.bf16.msra.mxu0 %v484
        %495 = vmatprep.subr.bf16.mxu0 0
        %496 = vmatpush1.bf16.msra.mxu0 %v483
        %497 = vmatprep.subr.bf16.mxu0 0
        %498 = vmatpush1.bf16.msra.mxu0 %v482
        %499 = vmatprep.subr.bf16.mxu0 0
        %500 = vmatpush1.bf16.msra.mxu0 %v481
        %501 = vmatprep.subr.bf16.mxu0 0
        %502 = vmatpush1.bf16.msra.mxu0 %v480
        %503 = vmatprep.subr.bf16.mxu0 0
        %504 = vmatpush1.bf16.msra.mxu0 %v479
        %505 = vmatprep.subr.bf16.mxu0 0
        %506 = vmatpush1.bf16.msra.mxu0 %v478
        %507 = vmatprep.subr.bf16.mxu0 0
        %508 = vmatpush1.bf16.msra.mxu0 %v477
        %509 = vmatprep.subr.bf16.mxu0 0
        %510 = vmatpush2.bf16.msra.mxu0 0
        %511 = vmatprep.subr.bf16.mxu0 0
        %512 = vmatpush2.bf16.msra.mxu0 0
        %513 = vmatprep.subr.bf16.mxu0 0
        %514 = vmatpush2.bf16.msra.mxu0 0
        %515 = vmatprep.subr.bf16.mxu0 0
        %516 = vmatpush2.bf16.msra.mxu0 0
        %517 = vmatprep.subr.bf16.mxu0 0
        %518 = vmatpush2.bf16.msra.mxu0 0
        %519 = vmatprep.subr.bf16.mxu0 0
        %520 = vmatpush2.bf16.msra.mxu0 0
        %521 = vmatprep.subr.bf16.mxu0 0
        %522 = vmatpush2.bf16.msra.mxu0 0
        %523 = vmatprep.subr.bf16.mxu0 0
        %524 = vmatpush2.bf16.msra.mxu0 0
        %525 = vmatprep.mubr.bf16.mxu0 0
        %526 = vmatmul.mubr.bf16.gmra.mxu0 %v423
        %v527 = vpop.f32.mrf.mxu0
        %v528 = vadd.f32 %v444, %v527
        %v529 = vpop.f32.mrf.mxu0
        %v530 = vpop.f32.mrf.mxu0
        %v531 = vpop.f32.mrf.mxu0
        %532 = vdwg.mxu0
        %v533 = vmax.f32 %v528, 0.0
        %v534 = vpack.c.bf16 %v533, %v533
        %v535 = vld [vmem:[#allocation10] sm:$0xf]
        %v536 = vld [vmem:[#allocation10 + $0x4] sm:$0xf]
        %v537 = vld [vmem:[#allocation10 + $0x8] sm:$0xf]
        %v538 = vld [vmem:[#allocation10 + $0xc] sm:$0xf]
        %v539 = vld [vmem:[#allocation10 + $0x10] sm:$0xf]
        %v540 = vld [vmem:[#allocation10 + $0x14] sm:$0xf]
        %v541 = vld [vmem:[#allocation10 + $0x18] sm:$0xf]
        %v542 = vld [vmem:[#allocation10 + $0x1c] sm:$0xf]
        %v543 = vld [vmem:[#allocation10 + $0x20] sm:$0xf]
        %v544 = vld [vmem:[#allocation10 + $0x24] sm:$0xf]
        %v545 = vld [vmem:[#allocation10 + $0x28] sm:$0xf]
        %v546 = vld [vmem:[#allocation10 + $0x2c] sm:$0xf]
        %v547 = vld [vmem:[#allocation10 + $0x30] sm:$0xf]
        %v548 = vld [vmem:[#allocation10 + $0x34] sm:$0xf]
        %v549 = vld [vmem:[#allocation10 + $0x38] sm:$0xf]
        %v550 = vld [vmem:[#allocation10 + $0x3c] sm:$0xf]
        %v551 = vld [vmem:[%s5 + $0x1] sm:$0x1]
        %v552 = vlaneseq
        %v553 = vshrl.u32 %v552, 7
        %v554 = vsub.s32 0, %v553
        %v555 = vrot.slane %v551, %v554
        %v572 = vunpack.c.l.b16 %v535
        %v573 = vunpack.c.l.b16 %v536
        %v574 = vunpack.c.l.b16 %v537
        %v575 = vunpack.c.l.b16 %v538
        %v576 = vunpack.c.l.b16 %v539
        %v577 = vunpack.c.l.b16 %v540
        %v578 = vunpack.c.l.b16 %v541
        %v579 = vunpack.c.l.b16 %v542
        %v580 = vunpack.c.l.b16 %v543
        %v581 = vunpack.c.l.b16 %v544
        %v582 = vunpack.c.l.b16 %v545
        %v583 = vunpack.c.l.b16 %v546
        %v584 = vunpack.c.l.b16 %v547
        %v585 = vunpack.c.l.b16 %v548
        %v586 = vunpack.c.l.b16 %v549
        %v587 = vunpack.c.l.b16 %v550
        %v588 = vpack.c.b16 %v573, %v572
        %v589 = vpack.c.b16 %v575, %v574
        %v590 = vpack.c.b16 %v577, %v576
        %v591 = vpack.c.b16 %v579, %v578
        %v592 = vpack.c.b16 %v581, %v580
        %v593 = vpack.c.b16 %v583, %v582
        %v594 = vpack.c.b16 %v585, %v584
        %v595 = vpack.c.b16 %v587, %v586
        %604 = vmatprep.subr.bf16.mxu0 0
        %605 = vmatpush1.bf16.msra.mxu0 %v595
        %606 = vmatprep.subr.bf16.mxu0 0
        %607 = vmatpush1.bf16.msra.mxu0 %v594
        %608 = vmatprep.subr.bf16.mxu0 0
        %609 = vmatpush1.bf16.msra.mxu0 %v593
        %610 = vmatprep.subr.bf16.mxu0 0
        %611 = vmatpush1.bf16.msra.mxu0 %v592
        %612 = vmatprep.subr.bf16.mxu0 0
        %613 = vmatpush1.bf16.msra.mxu0 %v591
        %614 = vmatprep.subr.bf16.mxu0 0
        %615 = vmatpush1.bf16.msra.mxu0 %v590
        %616 = vmatprep.subr.bf16.mxu0 0
        %617 = vmatpush1.bf16.msra.mxu0 %v589
        %618 = vmatprep.subr.bf16.mxu0 0
        %619 = vmatpush1.bf16.msra.mxu0 %v588
        %620 = vmatprep.subr.bf16.mxu0 0
        %621 = vmatpush2.bf16.msra.mxu0 0
        %622 = vmatprep.subr.bf16.mxu0 0
        %623 = vmatpush2.bf16.msra.mxu0 0
        %624 = vmatprep.subr.bf16.mxu0 0
        %625 = vmatpush2.bf16.msra.mxu0 0
        %626 = vmatprep.subr.bf16.mxu0 0
        %627 = vmatpush2.bf16.msra.mxu0 0
        %628 = vmatprep.subr.bf16.mxu0 0
        %629 = vmatpush2.bf16.msra.mxu0 0
        %630 = vmatprep.subr.bf16.mxu0 0
        %631 = vmatpush2.bf16.msra.mxu0 0
        %632 = vmatprep.subr.bf16.mxu0 0
        %633 = vmatpush2.bf16.msra.mxu0 0
        %634 = vmatprep.subr.bf16.mxu0 0
        %635 = vmatpush2.bf16.msra.mxu0 0
        %636 = vmatprep.mubr.bf16.mxu0 0
        %637 = vmatmul.mubr.bf16.gmra.mxu0 %v534
        %v638 = vpop.f32.mrf.mxu0
        %v639 = vadd.f32 %v555, %v638
        %v640 = vpop.f32.mrf.mxu0
        %v641 = vpop.f32.mrf.mxu0
        %v642 = vpop.f32.mrf.mxu0
        %643 = vdwg.mxu0
        %644 = vst [vmem:[%s360] sm:$0xff] %v639
        %s645 = sand.u32 %s187, 1
        %s646 = scalar_lea.sflag [#allocation4], %s645
        %s647 = sand.u32 %s187, 1
        %s648 = smul.addr %s647, 8
        %s649 = scalar_lea.vmem [#allocation11], %s648
        // Predicated region
        $region65: #{tpu_custom_call.1} parent=43 // pred_check
          %p650 = pneg %p197
        $region66: #{tpu_custom_call.1} parent=43 // pred_check_branch
          %652 = sbr.rel (%p650) target = $region68
        $region67: #{tpu_custom_call.1} parent=43 // pred_region
          %s654 = ssub.s32 128, 128
          %655 = vsyncadd %s646, %s654
          %s656 = sadd.s32 %s32, %s31
          %s657 = smul.addr %s656, 128
          %s658 = scalar_lea.hbm %s6, %s657
          %s660 = sshll.u32 %s649, 4
          %s661 = int_to_ptr.vmem [resolvable:$true] %s660
          %663 = dma.vmem_to_hbm [thread:$0]  %s661, 128, %s658, %s646
        $region68: #{tpu_custom_call.1} parent=43 // pred_fallthru
          _
      $region44: #{tpu_custom_call.1} parent=5 // pred_fallthru
        _
      %p664 = scmp.le.s32.totalorder 2, %s22
      // Predicated region
      $region69: #{tpu_custom_call.1} parent=5 // pred_check
        %p665 = pneg %p664
      $region70: #{tpu_custom_call.1} parent=5 // pred_check_branch
        %667 = sbr.rel (%p665) target = $region72
      $region71: #{tpu_custom_call.1} parent=5 // pred_region
        %s668 = ssub.s32 %s22, 2
        // Predicated region
        $region73: #{tpu_custom_call.1} parent=71 // pred_check
          %p669 = pneg %p203
        $region74: #{tpu_custom_call.1} parent=71 // pred_check_branch
          %671 = sbr.rel (%p669) target = $region76
        $region75: #{tpu_custom_call.1} parent=71 // pred_region
          %s672 = sand.u32 %s188, 1
          %s673 = scalar_lea.sflag [#allocation4], %s672
          %s674 = sand.u32 %s188, 1
          %s675 = smul.addr %s674, 8
          %s676 = scalar_lea.vmem [#allocation11], %s675
          %677 = dma.done %s673, 128
        $region76: #{tpu_custom_call.1} parent=71 // pred_fallthru
          _
      $region72: #{tpu_custom_call.1} parent=5 // pred_fallthru
        _
    $region6: #{tpu_custom_call.1} parent=1 // loop_footer
      %s26 = sadd.s32 1, %s22
    $region7: #{tpu_custom_call.1} parent=1 // loop_footer_branch
      %21 = sbr.rel target = $region3
    $region8: #{tpu_custom_call.1} parent=1 // loop_exit
      _
    %678 = vsyncpa [#allocation3], 1
    %s679 = scalar_lea.sflag [#allocation3], 1
    %680 = vsyncpa %s679, 1
    %681 = vsyncpa [#allocation6], 1
    %s682 = scalar_lea.sflag [#allocation6], 1
    %683 = vsyncpa %s682, 1
    %684 = vsyncpa [#allocation9], 1
    %685 = vsyncpa [#allocation4], 1
    %s686 = scalar_lea.sflag [#allocation4], 1
    %687 = vsyncpa %s686, 1

</llo_original>
